<compile_context>
chip_gen: v6e
topology: v6e:2x2x1
jax: 0.10.0
libtpu: 0.0.40
codegen_flags: <defaults>
</compile_context>

<pallas_src>
import functools

import jax
import jax.numpy as jnp
from jax.experimental import pallas as pl
from jax.experimental.pallas import tpu as pltpu


# ---------------------------------------------------------------------------
# Kernel
# ---------------------------------------------------------------------------
def _quantile_kernel(sa_ref, tau_ref,
                     w1_ref, b1_ref, w2_ref, b2_ref, w3_ref, b3_ref,
                     out_ref, *, compute_dtype):
    """One batch tile: broadcast-multiply + 2 MXU layers + VPU/XLU final layer."""
    TB, N, E = tau_ref.shape
    H2p = w2_ref.shape[1]

    sa = sa_ref[...]                                   # (TB, E)      f32
    tau = tau_ref[...]                                 # (TB, N, E)   f32

    # embeddings = (sa[:, None, :] * tau)  ->  flatten rows for 2-D MXU matmuls
    emb = (sa[:, None, :] * tau).reshape(TB * N, E)    # (TB*N, E)

    cd = compute_dtype
    # Layer 1: Linear + ReLU   (MXU, f32 accumulation)
    h1 = jnp.dot(emb.astype(cd), w1_ref[...].astype(cd),
                 preferred_element_type=jnp.float32)
    h1 = jnp.maximum(h1 + b1_ref[...], 0.0)            # (TB*N, H1p)

    # Layer 2: Linear + ReLU
    h2 = jnp.dot(h1.astype(cd), w2_ref[...].astype(cd),
                 preferred_element_type=jnp.float32)
    h2 = jnp.maximum(h2 + b2_ref[...], 0.0)            # (TB*N, H2p)

    # Output layer (H2 -> 1): VPU multiply + cross-lane reduce instead of a
    # width-1 MXU matmul; produces a lane-dense (TB, N) tile directly.
    w3_row = w3_ref[...]                               # (1, H2p)     f32
    q = jnp.sum(h2.reshape(TB, N, H2p) * w3_row, axis=-1) + b3_ref[0]
    out_ref[...] = q.astype(out_ref.dtype)             # (TB, N)


# ---------------------------------------------------------------------------
# Wrapper
# ---------------------------------------------------------------------------
def _round_up(x, m):
    return ((x + m - 1) // m) * m


def _pad_to(a, shape):
    pads = [(0, t - s) for s, t in zip(a.shape, shape)]
    if any(p[1] for p in pads):
        a = jnp.pad(a, pads)
    return a


def _pick_batch_tile(B, N, E, H1p, H2p, vmem_budget=8 << 20):
    """Largest batch tile whose double-buffered DMA + intermediates fit budget."""
    weight_bytes = 4 * 2 * (E * H1p + H1p + H1p * H2p + H2p + H2p)
    per_row = 4 * (2 * N * E + 2 * E + 2 * N          # tau/sa/out (x2 buffers)
                   + N * (E + H1p + H2p))             # emb/h1/h2 intermediates
    cap = max(1, (vmem_budget - weight_bytes) // max(per_row, 1))
    if B <= cap:
        return B
    tb = min(int(cap), B) // 8 * 8                    # multiple of 8 (sublane)
    while tb >= 8:
        if B % tb == 0:
            return tb
        tb -= 8
    return B  # fallback: whole batch resident


def quantile_network_forward(s_a_embedding, tau_embeddings, params, *,
                             compute_dtype=jnp.float32, batch_tile=None,
                             lane=128):
    """Pallas forward: returns quantiles of shape (B, N, 1)."""
    w1, b1, w2, b2, w3, b3 = params
    B, E = s_a_embedding.shape
    assert tau_embeddings.shape[0] == B
    assert tau_embeddings.shape[2] == E
    N = tau_embeddings.shape[1]
    H1, H2 = w1.shape[1], w2.shape[1]

    # Zero-pad hidden dims to full 128-lane width (exact for a ReLU MLP).
    H1p, H2p = _round_up(H1, lane), _round_up(H2, lane)
    w1p = _pad_to(jnp.asarray(w1, jnp.float32), (E, H1p))
    b1p = _pad_to(jnp.asarray(b1, jnp.float32).reshape(1, H1), (1, H1p))
    w2p = _pad_to(jnp.asarray(w2, jnp.float32), (H1p, H2p))
    b2p = _pad_to(jnp.asarray(b2, jnp.float32).reshape(1, H2), (1, H2p))
    w3p = _pad_to(jnp.asarray(w3, jnp.float32).reshape(H2, 1).T, (1, H2p))
    b3s = jnp.asarray(b3, jnp.float32).reshape(1)     # scalar -> SMEM

    TB = batch_tile if batch_tile is not None else _pick_batch_tile(B, N, E, H1p, H2p)
    assert B % TB == 0, f"batch tile {TB} must divide batch {B}"
    grid = (B // TB,)

    kernel = functools.partial(_quantile_kernel, compute_dtype=compute_dtype)

    cost = pl.CostEstimate(
        flops=2 * B * N * (E * H1 + H1 * H2 + H2),
        transcendentals=0,
        bytes_accessed=4 * (B * E + B * N * E + B * N
                            + E * H1p + H1p + H1p * H2p + 2 * H2p + 1),
    )

    out2d = pl.pallas_call(
        kernel,
        out_shape=jax.ShapeDtypeStruct((B, N), jnp.float32),
        grid=grid,
        in_specs=[
            pl.BlockSpec((TB, E), lambda i: (i, 0)),          # s_a tile
            pl.BlockSpec((TB, N, E), lambda i: (i, 0, 0)),    # tau tile
            pl.BlockSpec((E, H1p), lambda i: (0, 0)),         # w1 (resident)
            pl.BlockSpec((1, H1p), lambda i: (0, 0)),         # b1
            pl.BlockSpec((H1p, H2p), lambda i: (0, 0)),       # w2
            pl.BlockSpec((1, H2p), lambda i: (0, 0)),         # b2
            pl.BlockSpec((1, H2p), lambda i: (0, 0)),         # w3 (row vector)
            pl.BlockSpec(memory_space=pltpu.MemorySpace.SMEM),  # b3 scalar
        ],
        out_specs=pl.BlockSpec((TB, N), lambda i: (i, 0)),
        compiler_params=pltpu.CompilerParams(
            dimension_semantics=("parallel",)),
        cost_estimate=cost,
    )(s_a_embedding, tau_embeddings, w1p, b1p, w2p, b2p, w3p, b3s)

    return out2d.reshape(B, N, 1)


# ---------------------------------------------------------------------------
# Parameter init + pure-JAX reference
# ---------------------------------------------------------------------------
def init_params(key, embedding_dim, net_arch):
    """Deterministic init mimicking nn.Linear default (uniform +-1/sqrt(fan_in))."""
    dims = [embedding_dim] + list(net_arch) + [1]
    params = []
    for i in range(len(dims) - 1):
        fan_in, fan_out = dims[i], dims[i + 1]
        key, kw, kb = jax.random.split(key, 3)
        bound = 1.0 / jnp.sqrt(fan_in)
        w = jax.random.uniform(kw, (fan_in, fan_out), jnp.float32, -bound, bound)
        b = jax.random.uniform(kb, (1, fan_out), jnp.float32, -bound, bound)
        params.extend([w, b])
    return tuple(params)


def reference_forward(s_a_embedding, tau_embeddings, params):
    """Pure-JAX reference mirroring the PyTorch module."""
    w1, b1, w2, b2, w3, b3 = params
    B, E = s_a_embedding.shape
    N = tau_embeddings.shape[1]
    x = (s_a_embedding[:, None, :] * tau_embeddings).reshape(B * N, E)
    h = jnp.maximum(x @ w1 + b1, 0.0)
    h = jnp.maximum(h @ w2 + b2, 0.0)
    q = h @ w3 + b3
    return q.reshape(B, N, 1)


if __name__ == "__main__":
    # Small shapes consistent with the module's forward:
    #   batch B=2, quantiles N=8, embedding_dim E=32, net_arch=[64, 64]
    B, N, E = 2, 8, 32
    net_arch = [64, 64]

    key = jax.random.PRNGKey(0)
    key, ksa, ktau, kparam = jax.random.split(key, 4)
    s_a_embedding = jax.random.normal(ksa, (B, E), jnp.float32)
    tau_embeddings = jax.random.normal(ktau, (B, N, E), jnp.float32)
    params = init_params(kparam, E, net_arch)

    quantiles = quantile_network_forward(s_a_embedding, tau_embeddings, params)
    quantiles = jax.block_until_ready(quantiles)
    assert quantiles.shape == (B, N, 1), quantiles.shape

    ref = reference_forward(s_a_embedding, tau_embeddings, params)
    assert jnp.allclose(quantiles, ref, atol=1e-5, rtol=1e-5), (
        "Pallas kernel output mismatch vs reference (f32 path)"
    )

    # Larger batch to exercise the grid (2 tiles, double-buffered tau DMA).
    B2 = 16
    key, ksa2, ktau2 = jax.random.split(key, 3)
    sa2 = jax.random.normal(ksa2, (B2, E), jnp.float32)
    tau2 = jax.random.normal(ktau2, (B2, N, E), jnp.float32)
    out2 = jax.block_until_ready(
        quantile_network_forward(sa2, tau2, params, batch_tile=8))
    ref2 = reference_forward(sa2, tau2, params)
    assert jnp.allclose(out2, ref2, atol=1e-5, rtol=1e-5), (
        "Pallas kernel output mismatch vs reference (gridded f32 path)"
    )

    # bf16 MXU operands (f32 accumulation) -- looser tolerance as expected.
    out3 = jax.block_until_ready(
        quantile_network_forward(sa2, tau2, params, batch_tile=8,
                                 compute_dtype=jnp.bfloat16))
    assert jnp.allclose(out3, ref2, atol=1e-1, rtol=1e-1), (
        "Pallas kernel output mismatch vs reference (bf16 MXU path)"
    )

    print("KERNEL_OK")
</pallas_src>

<mosaic_0001>
module attributes {stable_mosaic.version = 11 : i64} {
  func.func @_quantile_kernel(%arg0: i32, %arg1: memref<2x32xf32, #tpu.memory_space<vmem>>, %arg2: memref<2x8x32xf32, #tpu.memory_space<vmem>>, %arg3: memref<32x128xf32, #tpu.memory_space<vmem>>, %arg4: memref<1x128xf32, #tpu.memory_space<vmem>>, %arg5: memref<128x128xf32, #tpu.memory_space<vmem>>, %arg6: memref<1x128xf32, #tpu.memory_space<vmem>>, %arg7: memref<1x128xf32, #tpu.memory_space<vmem>>, %arg8: memref<1xf32, #tpu.memory_space<smem>>, %arg9: memref<2x8xf32, #tpu.memory_space<vmem>>) attributes {dimension_semantics = [#tpu.dimension_semantics<parallel>], iteration_bounds = array<i64: 1>, scalar_prefetch = 0 : i64, scratch_operands = 0 : i64, tpu.core_type = #tpu.core_type<tc>, window_params = [{transform_indices = @transform_0, window_bounds = array<i64: 2, 32>}, {transform_indices = @transform_1, window_bounds = array<i64: 2, 8, 32>}, {pipeline_mode = #tpu.pipeline_mode<synchronous>, transform_indices = @transform_2, window_bounds = array<i64: 32, 128>}, {pipeline_mode = #tpu.pipeline_mode<synchronous>, transform_indices = @transform_3, window_bounds = array<i64: 1, 128>}, {pipeline_mode = #tpu.pipeline_mode<synchronous>, transform_indices = @transform_4, window_bounds = array<i64: 128, 128>}, {pipeline_mode = #tpu.pipeline_mode<synchronous>, transform_indices = @transform_5, window_bounds = array<i64: 1, 128>}, {pipeline_mode = #tpu.pipeline_mode<synchronous>, transform_indices = @transform_6, window_bounds = array<i64: 1, 128>}, {transform_indices = @transform_7, window_bounds = array<i64: 1>}, {transform_indices = @transform_8, window_bounds = array<i64: 2, 8>}]} {
    %c0 = arith.constant 0 : index
    %c0_0 = arith.constant 0 : index
    %0 = vector.load %arg1[%c0, %c0_0] : memref<2x32xf32, #tpu.memory_space<vmem>>, vector<2x32xf32>
    %c0_1 = arith.constant 0 : index
    %c0_2 = arith.constant 0 : index
    %c0_3 = arith.constant 0 : index
    %1 = vector.load %arg2[%c0_1, %c0_2, %c0_3] : memref<2x8x32xf32, #tpu.memory_space<vmem>>, vector<2x8x32xf32>
    %2 = vector.shape_cast %0 : vector<2x32xf32> to vector<2x1x32xf32>
    %3 = vector.broadcast %2 : vector<2x1x32xf32> to vector<2x8x32xf32>
    %4 = arith.mulf %3, %1 : vector<2x8x32xf32>
    %5 = vector.shape_cast %4 : vector<2x8x32xf32> to vector<16x32xf32>
    %c0_4 = arith.constant 0 : index
    %c0_5 = arith.constant 0 : index
    %6 = vector.load %arg3[%c0_4, %c0_5] : memref<32x128xf32, #tpu.memory_space<vmem>>, vector<32x128xf32>
    %cst = arith.constant dense<0.000000e+00> : vector<16x128xf32>
    %7 = tpu.matmul %5, %6, %cst {dimension_numbers = #tpu.dot_dimension_numbers<[1], [0], [0], [1], [0, 0, 1, 1], [], []>} : vector<16x32xf32>, vector<32x128xf32>, vector<16x128xf32> -> vector<16x128xf32>
    %c0_6 = arith.constant 0 : index
    %c0_7 = arith.constant 0 : index
    %8 = vector.load %arg4[%c0_6, %c0_7] : memref<1x128xf32, #tpu.memory_space<vmem>>, vector<1x128xf32>
    %9 = vector.broadcast %8 : vector<1x128xf32> to vector<16x128xf32>
    %10 = arith.addf %7, %9 : vector<16x128xf32>
    %cst_8 = arith.constant 0.000000e+00 : f32
    %11 = vector.broadcast %cst_8 : f32 to vector<16x128xf32>
    %12 = arith.maximumf %10, %11 : vector<16x128xf32>
    %c0_9 = arith.constant 0 : index
    %c0_10 = arith.constant 0 : index
    %13 = vector.load %arg5[%c0_9, %c0_10] : memref<128x128xf32, #tpu.memory_space<vmem>>, vector<128x128xf32>
    %cst_11 = arith.constant dense<0.000000e+00> : vector<16x128xf32>
    %14 = tpu.matmul %12, %13, %cst_11 {dimension_numbers = #tpu.dot_dimension_numbers<[1], [0], [0], [1], [0, 0, 1, 1], [], []>} : vector<16x128xf32>, vector<128x128xf32>, vector<16x128xf32> -> vector<16x128xf32>
    %c0_12 = arith.constant 0 : index
    %c0_13 = arith.constant 0 : index
    %15 = vector.load %arg6[%c0_12, %c0_13] : memref<1x128xf32, #tpu.memory_space<vmem>>, vector<1x128xf32>
    %16 = vector.broadcast %15 : vector<1x128xf32> to vector<16x128xf32>
    %17 = arith.addf %14, %16 : vector<16x128xf32>
    %cst_14 = arith.constant 0.000000e+00 : f32
    %18 = vector.broadcast %cst_14 : f32 to vector<16x128xf32>
    %19 = arith.maximumf %17, %18 : vector<16x128xf32>
    %c0_15 = arith.constant 0 : index
    %c0_16 = arith.constant 0 : index
    %20 = vector.load %arg7[%c0_15, %c0_16] : memref<1x128xf32, #tpu.memory_space<vmem>>, vector<1x128xf32>
    %21 = vector.shape_cast %19 : vector<16x128xf32> to vector<2x8x128xf32>
    %22 = vector.shape_cast %20 : vector<1x128xf32> to vector<1x1x128xf32>
    %23 = vector.broadcast %22 : vector<1x1x128xf32> to vector<2x8x128xf32>
    %24 = arith.mulf %21, %23 : vector<2x8x128xf32>
    %cst_17 = arith.constant dense<0.000000e+00> : vector<2x8xf32>
    %25 = vector.multi_reduction <add>, %24, %cst_17 [2] : vector<2x8x128xf32> to vector<2x8xf32>
    %c0_18 = arith.constant 0 : index
    %26 = memref.load %arg8[%c0_18] : memref<1xf32, #tpu.memory_space<smem>>
    %27 = vector.broadcast %26 : f32 to vector<2x8xf32>
    %28 = arith.addf %25, %27 : vector<2x8xf32>
    %c0_19 = arith.constant 0 : index
    %c0_20 = arith.constant 0 : index
    %29 = vector.load %arg9[%c0_19, %c0_20] : memref<2x8xf32, #tpu.memory_space<vmem>>, vector<2x8xf32>
    tpu.vector_store %arg9[%c0_19, %c0_20], %28 {strides = array<i32>} : memref<2x8xf32, #tpu.memory_space<vmem>>, vector<2x8xf32>,
    return
  }
  func.func @transform_0(%arg0: i32) -> (i32, i32) {
    %c0_i32 = arith.constant 0 : i32
    %c0_i32_0 = arith.constant 0 : i32
    return %arg0, %c0_i32 : i32, i32
  }
  func.func @transform_1(%arg0: i32) -> (i32, i32, i32) {
    %c0_i32 = arith.constant 0 : i32
    %c0_i32_0 = arith.constant 0 : i32
    %c0_i32_1 = arith.constant 0 : i32
    return %arg0, %c0_i32, %c0_i32_0 : i32, i32, i32
  }
  func.func @transform_2(%arg0: i32) -> (i32, i32) {
    %c0_i32 = arith.constant 0 : i32
    %c0_i32_0 = arith.constant 0 : i32
    %c0_i32_1 = arith.constant 0 : i32
    return %c0_i32, %c0_i32_0 : i32, i32
  }
  func.func @transform_3(%arg0: i32) -> (i32, i32) {
    %c0_i32 = arith.constant 0 : i32
    %c0_i32_0 = arith.constant 0 : i32
    %c0_i32_1 = arith.constant 0 : i32
    return %c0_i32, %c0_i32_0 : i32, i32
  }
  func.func @transform_4(%arg0: i32) -> (i32, i32) {
    %c0_i32 = arith.constant 0 : i32
    %c0_i32_0 = arith.constant 0 : i32
    %c0_i32_1 = arith.constant 0 : i32
    return %c0_i32, %c0_i32_0 : i32, i32
  }
  func.func @transform_5(%arg0: i32) -> (i32, i32) {
    %c0_i32 = arith.constant 0 : i32
    %c0_i32_0 = arith.constant 0 : i32
    %c0_i32_1 = arith.constant 0 : i32
    return %c0_i32, %c0_i32_0 : i32, i32
  }
  func.func @transform_6(%arg0: i32) -> (i32, i32) {
    %c0_i32 = arith.constant 0 : i32
    %c0_i32_0 = arith.constant 0 : i32
    %c0_i32_1 = arith.constant 0 : i32
    return %c0_i32, %c0_i32_0 : i32, i32
  }
  func.func @transform_7(%arg0: i32) -> i32 {
    %c0_i32 = arith.constant 0 : i32
    %c0_i32_0 = arith.constant 0 : i32
    return %c0_i32 : i32
  }
  func.func @transform_8(%arg0: i32) -> (i32, i32) {
    %c0_i32 = arith.constant 0 : i32
    %c0_i32_0 = arith.constant 0 : i32
    return %arg0, %c0_i32 : i32, i32
  }
}

</mosaic_0001>

<llo_original>
// kernel: tpu_custom_call.1
$region0: #{tpu_custom_call.1}
  #allocation0 [shape = 'u32[]', space=smem, size = 0x4, offset = 0x4, fixed_abs, tag = 'smem constant byte address 0x4 - core index']
  #allocation1 [shape = 'u32[144,128]{1,0:T(1,128)}', space=vmem, size = 0x12000, scoped, tag = 'internal scratch']
  #allocation2 [shape = 'f32[1]{0:T(128)S(6)}', space=smem, size = 0x200, scoped, tag = 'scoped memory for tpu_custom_call.1']
  %s0 = inlined_call_operand.vmem [shape: f32[2,32], index: 0, kind: input, shape index: {}]
  %s1 = inlined_call_operand.hbm [shape: f32[2,8,32], index: 1, kind: input, shape index: {}]
  %s2 = inlined_call_operand.hbm [shape: f32[32,128], index: 2, kind: input, shape index: {}]
  %s3 = inlined_call_operand.vmem [shape: f32[1,128], index: 3, kind: input, shape index: {}]
  %s4 = inlined_call_operand.hbm [shape: f32[128,128], index: 4, kind: input, shape index: {}]
  %s5 = inlined_call_operand.vmem [shape: f32[1,128], index: 5, kind: input, shape index: {}]
  %s6 = inlined_call_operand.vmem [shape: f32[1,128], index: 6, kind: input, shape index: {}]
  %s7 = inlined_call_operand.<no memory space> [shape: f32[1], index: 7, kind: input, shape index: {}]
  %s8 = inlined_call_operand.hbm [shape: f32[2,8], index: 8, kind: output, shape index: {}]
  %s9 = sld [smem:[#allocation0]]
  $region54: #{tpu_custom_call.1} parent=0
    _
  %s11 = ssub.s32 1, %s9
  %s12 = scalar_select 0, %s11, %s9
  %13 = sst [smem:[#allocation2]] %s7
  $region1: #{tpu_custom_call.1} parent=0
    #allocation3 [shape = 'u8[8192]{0}', space=vmem, size = 0x2000, scoped, tag = 'input window, operand 1, single buffered']
    #allocation4 [shape = 's32[1]{0}', space=sflag, size = 0x4, scoped, tag = 'scoped memory for tpu_custom_call.1']
    #allocation5 [shape = 's32[1]{0}', space=sflag, size = 0x4, scoped, tag = 'scoped memory for tpu_custom_call.1']
    #allocation6 [shape = 'u8[16384]{0}', space=vmem, size = 0x4000, scoped, tag = 'input window, operand 2, single buffered']
    #allocation7 [shape = 's32[1]{0}', space=sflag, size = 0x4, scoped, tag = 'scoped memory for tpu_custom_call.1']
    #allocation8 [shape = 'u8[65536]{0}', space=vmem, size = 0x10000, scoped, tag = 'input window, operand 4, single buffered']
    #allocation9 [shape = 'u8[1024]{0}', space=vmem, size = 0x400, scoped, tag = 'output window, operand 0, single buffered']
    %14 = vsyncpa [#allocation4], 0
    %15 = vsyncpa [#allocation7], 0
    %16 = vsyncpa [#allocation5], 0
    // Predicated region
    $region2: #{tpu_custom_call.1} parent=1 // pred_check
      _
    $region3: #{tpu_custom_call.1} parent=1 // pred_check_branch
      %18 = sbr.rel (0) target = $region5
    $region4: #{tpu_custom_call.1} parent=1 // pred_region
      _
    $region5: #{tpu_custom_call.1} parent=1 // pred_fallthru
      _
    // Predicated region
    $region6: #{tpu_custom_call.1} parent=1 // pred_check
      _
    $region7: #{tpu_custom_call.1} parent=1 // pred_check_branch
      %20 = sbr.rel (0) target = $region9
    $region8: #{tpu_custom_call.1} parent=1 // pred_region
      %s22 = ssub.s32 256, 256
      %23 = vsyncadd [#allocation4], %s22
      %s24 = sshll.u32 [#allocation3], 4
      %s25 = int_to_ptr.vmem [resolvable:$true] %s24
      %30 = dma.hbm_to_vmem [thread:$0]  %s1, 256, %s25, [#allocation4], 128, 128, 8
    $region9: #{tpu_custom_call.1} parent=1 // pred_fallthru
      _
    // Predicated region
    $region10: #{tpu_custom_call.1} parent=1 // pred_check
      _
    $region11: #{tpu_custom_call.1} parent=1 // pred_check_branch
      %32 = sbr.rel (0) target = $region13
    $region12: #{tpu_custom_call.1} parent=1 // pred_region
      %s34 = ssub.s32 512, 512
      %35 = vsyncadd [#allocation7], %s34
      %s36 = sshll.u32 [#allocation6], 4
      %s37 = int_to_ptr.vmem [resolvable:$true] %s36
      %42 = dma.hbm_to_vmem [thread:$0]  %s2, 512, %s37, [#allocation7], 128, 128, 8
    $region13: #{tpu_custom_call.1} parent=1 // pred_fallthru
      _
    // Predicated region
    $region14: #{tpu_custom_call.1} parent=1 // pred_check
      _
    $region15: #{tpu_custom_call.1} parent=1 // pred_check_branch
      %44 = sbr.rel (0) target = $region17
    $region16: #{tpu_custom_call.1} parent=1 // pred_region
      _
    $region17: #{tpu_custom_call.1} parent=1 // pred_fallthru
      _
    // Predicated region
    $region18: #{tpu_custom_call.1} parent=1 // pred_check
      _
    $region19: #{tpu_custom_call.1} parent=1 // pred_check_branch
      %46 = sbr.rel (0) target = $region21
    $region20: #{tpu_custom_call.1} parent=1 // pred_region
      %s48 = ssub.s32 2048, 2048
      %49 = vsyncadd [#allocation7], %s48
      %s50 = sshll.u32 [#allocation8], 4
      %s51 = int_to_ptr.vmem [resolvable:$true] %s50
      %56 = dma.hbm_to_vmem [thread:$0]  %s4, 2048, %s51, [#allocation7], 128, 128, 8
    $region21: #{tpu_custom_call.1} parent=1 // pred_fallthru
      _
    // Predicated region
    $region22: #{tpu_custom_call.1} parent=1 // pred_check
      _
    $region23: #{tpu_custom_call.1} parent=1 // pred_check_branch
      %58 = sbr.rel (0) target = $region25
    $region24: #{tpu_custom_call.1} parent=1 // pred_region
      _
    $region25: #{tpu_custom_call.1} parent=1 // pred_fallthru
      _
    // Predicated region
    $region26: #{tpu_custom_call.1} parent=1 // pred_check
      _
    $region27: #{tpu_custom_call.1} parent=1 // pred_check_branch
      %60 = sbr.rel (0) target = $region29
    $region28: #{tpu_custom_call.1} parent=1 // pred_region
      _
    $region29: #{tpu_custom_call.1} parent=1 // pred_fallthru
      _
    // Predicated region
    $region30: #{tpu_custom_call.1} parent=1 // pred_check
      _
    $region31: #{tpu_custom_call.1} parent=1 // pred_check_branch
      %62 = sbr.rel (0) target = $region33
    $region32: #{tpu_custom_call.1} parent=1 // pred_region
      _
    $region33: #{tpu_custom_call.1} parent=1 // pred_fallthru
      _
    // Predicated region
    $region34: #{tpu_custom_call.1} parent=1 // pred_check
      _
    $region35: #{tpu_custom_call.1} parent=1 // pred_check_branch
      %64 = sbr.rel (0) target = $region37
    $region36: #{tpu_custom_call.1} parent=1 // pred_region
      %65 = dma.done [#allocation4], 256
    $region37: #{tpu_custom_call.1} parent=1 // pred_fallthru
      _
    // Predicated region
    $region38: #{tpu_custom_call.1} parent=1 // pred_check
      _
    $region39: #{tpu_custom_call.1} parent=1 // pred_check_branch
      %67 = sbr.rel (0) target = $region41
    $region40: #{tpu_custom_call.1} parent=1 // pred_region
      %68 = dma.done [#allocation7], 512
    $region41: #{tpu_custom_call.1} parent=1 // pred_fallthru
      _
    // Predicated region
    $region42: #{tpu_custom_call.1} parent=1 // pred_check
      _
    $region43: #{tpu_custom_call.1} parent=1 // pred_check_branch
      %70 = sbr.rel (0) target = $region45
    $region44: #{tpu_custom_call.1} parent=1 // pred_region
      %71 = dma.done [#allocation7], 2048
    $region45: #{tpu_custom_call.1} parent=1 // pred_fallthru
      _
    %v72 = vld [vmem:[%s0] sm:$0x3]
    %v73 = vld [vmem:[#allocation3] sm:$0xff]
    %v74 = vld [vmem:[#allocation3 + $0x8] sm:$0xff]
    %v77 = vunpack.c.l.s4 1966171168
    %v78 = vunpack.c.0.s8 %v77
    %v79 = vlaneseq
    %v80 = vshrl.u32 %v79, 7
    %v81 = vsub.s32 %v78, %v80
    %v82 = vrot.slane %v72, %v81
    %v83 = vcombine.high %v82, %v82
    %v85 = vunpack.c.l.s4 1966171168
    %v86 = vunpack.c.0.s8 %v85
    %v87 = vlaneseq
    %v88 = vshrl.u32 %v87, 7
    %v89 = vsub.s32 %v86, %v88
    %v90 = vrot.slane %v82, %v89
    %v92 = vunpack.c.l.s4 1966171168
    %v93 = vunpack.c.0.s8 %v92
    %v94 = vlaneseq
    %v95 = vshrl.u32 %v94, 7
    %v96 = vsub.s32 %v93, %v95
    %v97 = vrot.slane %v83, %v96
    %v98 = vlaneseq
    %v99 = vshrl.u32 %v98, 7
    %v100 = vsub.s32 0, %v99
    %v101 = vrot.slane %v90, %v100
    %v102 = vlaneseq
    %v103 = vshrl.u32 %v102, 7
    %v104 = vsub.s32 0, %v103
    %v105 = vrot.slane %v97, %v104
    %v108 = vmul.f32 %v101, %v73
    %v109 = vmul.f32 %v105, %v74
    %v110 = vld [vmem:[#allocation6] sm:$0xff]
    %v111 = vld [vmem:[#allocation6 + $0x8] sm:$0xff]
    %v112 = vld [vmem:[#allocation6 + $0x10] sm:$0xff]
    %v113 = vld [vmem:[#allocation6 + $0x18] sm:$0xff]
    %v114 = vld [vmem:[%s3] sm:$0x1]
    %v116 = vlaneseq
    %v117 = vshrl.u32 %v116, 7
    %v118 = vsub.s32 0, %v117
    %v119 = vrot.slane %v114, %v118
    %vm121 = vcmask 261120
    %v123 = vsel %vm121, %v108, 0
    %v126 = vsel %vm121, %v109, 0
    %128 = vmatprep.subr.mxu0 0.0
    %129 = vmatpush1.msra.mxu0 0.0
    %130 = vmatprep.subr.mxu0 0.0
    %131 = vmatpush1.msra.mxu0 0.0
    %132 = vmatprep.subr.mxu0 0.0
    %133 = vmatpush1.msra.mxu0 0.0
    %134 = vmatprep.subr.mxu0 0.0
    %135 = vmatpush1.msra.mxu0 0.0
    %136 = vmatprep.subr.mxu0 0.0
    %137 = vmatpush1.msra.mxu0 0.0
    %138 = vmatprep.subr.mxu0 0.0
    %139 = vmatpush1.msra.mxu0 0.0
    %140 = vmatprep.subr.mxu0 0.0
    %141 = vmatpush1.msra.mxu0 0.0
    %142 = vmatprep.subr.mxu0 0.0
    %143 = vmatpush1.msra.mxu0 0.0
    %144 = vmatprep.subr.mxu0 0.0
    %145 = vmatpush1.msra.mxu0 0.0
    %146 = vmatprep.subr.mxu0 0.0
    %147 = vmatpush1.msra.mxu0 0.0
    %148 = vmatprep.subr.mxu0 0.0
    %149 = vmatpush1.msra.mxu0 0.0
    %150 = vmatprep.subr.mxu0 0.0
    %151 = vmatpush1.msra.mxu0 0.0
    %152 = vmatprep.subr.mxu0 0.0
    %153 = vmatpush1.msra.mxu0 %v113
    %154 = vmatprep.subr.mxu0 0.0
    %155 = vmatpush1.msra.mxu0 %v112
    %156 = vmatprep.subr.mxu0 0.0
    %157 = vmatpush1.msra.mxu0 %v111
    %158 = vmatprep.subr.mxu0 0.0
    %159 = vmatpush1.msra.mxu0 %v110
    %160 = vmatprep.subr.mxu0 0.0
    %161 = vmatpush2.msra.mxu0 0.0
    %162 = vmatprep.subr.mxu0 0.0
    %163 = vmatpush2.msra.mxu0 0.0
    %164 = vmatprep.subr.mxu0 0.0
    %165 = vmatpush2.msra.mxu0 0.0
    %166 = vmatprep.subr.mxu0 0.0
    %167 = vmatpush2.msra.mxu0 0.0
    %168 = vmatprep.subr.mxu0 0.0
    %169 = vmatpush2.msra.mxu0 0.0
    %170 = vmatprep.subr.mxu0 0.0
    %171 = vmatpush2.msra.mxu0 0.0
    %172 = vmatprep.subr.mxu0 0.0
    %173 = vmatpush2.msra.mxu0 0.0
    %174 = vmatprep.subr.mxu0 0.0
    %175 = vmatpush2.msra.mxu0 0.0
    %176 = vmatprep.subr.mxu0 0.0
    %177 = vmatpush2.msra.mxu0 0.0
    %178 = vmatprep.subr.mxu0 0.0
    %179 = vmatpush2.msra.mxu0 0.0
    %180 = vmatprep.subr.mxu0 0.0
    %181 = vmatpush2.msra.mxu0 0.0
    %182 = vmatprep.subr.mxu0 0.0
    %183 = vmatpush2.msra.mxu0 0.0
    %184 = vmatprep.subr.mxu0 0.0
    %185 = vmatpush2.msra.mxu0 0.0
    %186 = vmatprep.subr.mxu0 0.0
    %187 = vmatpush2.msra.mxu0 0.0
    %188 = vmatprep.subr.mxu0 0.0
    %189 = vmatpush2.msra.mxu0 0.0
    %190 = vmatprep.subr.mxu0 0.0
    %191 = vmatpush2.msra.mxu0 0.0
    %192 = vmatprep.mubr.f32.mxu0 0.0
    %193 = vmatmul.mubr.f32.gmra.mxu0 %v123
    %v194 = vpop.f32.mrf.mxu0
    %v195 = vadd.f32 %v119, %v194
    %v196 = vpop.f32.mrf.mxu0
    %197 = vmatprep.mubr.f32.mxu0 0.0
    %198 = vmatmul.mubr.f32.gmra.mxu0 %v126
    %v199 = vpop.f32.mrf.mxu0
    %v200 = vadd.f32 %v119, %v199
    %v201 = vpop.f32.mrf.mxu0
    %202 = vdwg.mxu0
    %v203 = vmax.f32 %v195, 0.0
    %v204 = vmax.f32 %v200, 0.0
    %v205 = vld [vmem:[#allocation8] sm:$0xff]
    %v206 = vld [vmem:[#allocation8 + $0x8] sm:$0xff]
    %v207 = vld [vmem:[#allocation8 + $0x10] sm:$0xff]
    %v208 = vld [vmem:[#allocation8 + $0x18] sm:$0xff]
    %v209 = vld [vmem:[#allocation8 + $0x20] sm:$0xff]
    %v210 = vld [vmem:[#allocation8 + $0x28] sm:$0xff]
    %v211 = vld [vmem:[#allocation8 + $0x30] sm:$0xff]
    %v212 = vld [vmem:[#allocation8 + $0x38] sm:$0xff]
    %v213 = vld [vmem:[#allocation8 + $0x40] sm:$0xff]
    %v214 = vld [vmem:[#allocation8 + $0x48] sm:$0xff]
    %v215 = vld [vmem:[#allocation8 + $0x50] sm:$0xff]
    %v216 = vld [vmem:[#allocation8 + $0x58] sm:$0xff]
    %v217 = vld [vmem:[#allocation8 + $0x60] sm:$0xff]
    %v218 = vld [vmem:[#allocation8 + $0x68] sm:$0xff]
    %v219 = vld [vmem:[#allocation8 + $0x70] sm:$0xff]
    %v220 = vld [vmem:[#allocation8 + $0x78] sm:$0xff]
    %v221 = vld [vmem:[%s5] sm:$0x1]
    %v223 = vlaneseq
    %v224 = vshrl.u32 %v223, 7
    %v225 = vsub.s32 0, %v224
    %v226 = vrot.slane %v221, %v225
    %228 = vmatprep.subr.mxu0 0.0
    %229 = vmatpush1.msra.mxu0 %v220
    %230 = vmatprep.subr.mxu0 0.0
    %231 = vmatpush1.msra.mxu0 %v219
    %232 = vmatprep.subr.mxu0 0.0
    %233 = vmatpush1.msra.mxu0 %v218
    %234 = vmatprep.subr.mxu0 0.0
    %235 = vmatpush1.msra.mxu0 %v217
    %236 = vmatprep.subr.mxu0 0.0
    %237 = vmatpush1.msra.mxu0 %v216
    %238 = vmatprep.subr.mxu0 0.0
    %239 = vmatpush1.msra.mxu0 %v215
    %240 = vmatprep.subr.mxu0 0.0
    %241 = vmatpush1.msra.mxu0 %v214
    %242 = vmatprep.subr.mxu0 0.0
    %243 = vmatpush1.msra.mxu0 %v213
    %244 = vmatprep.subr.mxu0 0.0
    %245 = vmatpush1.msra.mxu0 %v212
    %246 = vmatprep.subr.mxu0 0.0
    %247 = vmatpush1.msra.mxu0 %v211
    %248 = vmatprep.subr.mxu0 0.0
    %249 = vmatpush1.msra.mxu0 %v210
    %250 = vmatprep.subr.mxu0 0.0
    %251 = vmatpush1.msra.mxu0 %v209
    %252 = vmatprep.subr.mxu0 0.0
    %253 = vmatpush1.msra.mxu0 %v208
    %254 = vmatprep.subr.mxu0 0.0
    %255 = vmatpush1.msra.mxu0 %v207
    %256 = vmatprep.subr.mxu0 0.0
    %257 = vmatpush1.msra.mxu0 %v206
    %258 = vmatprep.subr.mxu0 0.0
    %259 = vmatpush1.msra.mxu0 %v205
    %260 = vmatprep.subr.mxu0 0.0
    %261 = vmatpush2.msra.mxu0 0.0
    %262 = vmatprep.subr.mxu0 0.0
    %263 = vmatpush2.msra.mxu0 0.0
    %264 = vmatprep.subr.mxu0 0.0
    %265 = vmatpush2.msra.mxu0 0.0
    %266 = vmatprep.subr.mxu0 0.0
    %267 = vmatpush2.msra.mxu0 0.0
    %268 = vmatprep.subr.mxu0 0.0
    %269 = vmatpush2.msra.mxu0 0.0
    %270 = vmatprep.subr.mxu0 0.0
    %271 = vmatpush2.msra.mxu0 0.0
    %272 = vmatprep.subr.mxu0 0.0
    %273 = vmatpush2.msra.mxu0 0.0
    %274 = vmatprep.subr.mxu0 0.0
    %275 = vmatpush2.msra.mxu0 0.0
    %276 = vmatprep.subr.mxu0 0.0
    %277 = vmatpush2.msra.mxu0 0.0
    %278 = vmatprep.subr.mxu0 0.0
    %279 = vmatpush2.msra.mxu0 0.0
    %280 = vmatprep.subr.mxu0 0.0
    %281 = vmatpush2.msra.mxu0 0.0
    %282 = vmatprep.subr.mxu0 0.0
    %283 = vmatpush2.msra.mxu0 0.0
    %284 = vmatprep.subr.mxu0 0.0
    %285 = vmatpush2.msra.mxu0 0.0
    %286 = vmatprep.subr.mxu0 0.0
    %287 = vmatpush2.msra.mxu0 0.0
    %288 = vmatprep.subr.mxu0 0.0
    %289 = vmatpush2.msra.mxu0 0.0
    %290 = vmatprep.subr.mxu0 0.0
    %291 = vmatpush2.msra.mxu0 0.0
    %292 = vmatprep.mubr.f32.mxu0 0.0
    %293 = vmatmul.mubr.f32.gmra.mxu0 %v203
    %v294 = vpop.f32.mrf.mxu0
    %v295 = vadd.f32 %v226, %v294
    %v296 = vpop.f32.mrf.mxu0
    %297 = vmatprep.mubr.f32.mxu0 0.0
    %298 = vmatmul.mubr.f32.gmra.mxu0 %v204
    %v299 = vpop.f32.mrf.mxu0
    %v300 = vadd.f32 %v226, %v299
    %v301 = vpop.f32.mrf.mxu0
    %302 = vdwg.mxu0
    %v303 = vmax.f32 %v295, 0.0
    %v304 = vmax.f32 %v300, 0.0
    %v305 = vld [vmem:[%s6] sm:$0x1]
    %v307 = vlaneseq
    %v308 = vshrl.u32 %v307, 7
    %v309 = vsub.s32 0, %v308
    %v310 = vrot.slane %v305, %v309
    %v312 = vmul.f32 %v303, %v310
    %v313 = vmul.f32 %v304, %v310
    %314 = vadd.xlane.f32.xlu0 %v312
    %v315 = vpop.xlane.xlu0 %314
    %316 = vadd.xlane.f32.xlu0 %v313
    %v317 = vpop.xlane.xlu0 %316
    %s318 = sld [smem:[#allocation2]]
    %v319 = vstv %s318
    %v320 = vadd.f32 %v315, %v319
    %v321 = vadd.f32 %v317, %v319
    %v324 = vlaneseq
    %v325 = vand.u32 %v324, 127
    %v326 = vlaneseq
    %v327 = vshrl.u32 %v326, 7
    %v328 = vsub.s32 %v325, %v327
    %v329 = vrot.slane %v320, %v328
    %v330 = vlaneseq
    %v331 = vshrl.u32 %v330, 7
    %v332 = vsub.s32 %v325, %v331
    %v333 = vrot.slane %v321, %v332
    %vm334 = vcmask 1041409
    %v335 = vsel %vm334, %v333, %v329
    %vm337 = vcmask 58368
    %338 = vst.msk [vmem:[#allocation9] sm:$0x3] %vm337, %v335
    // Predicated region
    $region46: #{tpu_custom_call.1} parent=1 // pred_check
      _
    $region47: #{tpu_custom_call.1} parent=1 // pred_check_branch
      %340 = sbr.rel (0) target = $region49
    $region48: #{tpu_custom_call.1} parent=1 // pred_region
      %s342 = ssub.s32 32, 32
      %343 = vsyncadd [#allocation5], %s342
      %s345 = sshll.u32 [#allocation9], 4
      %s346 = int_to_ptr.vmem [resolvable:$true] %s345
      %348 = dma.vmem_to_hbm [thread:$0]  %s346, 32, %s8, [#allocation5]
    $region49: #{tpu_custom_call.1} parent=1 // pred_fallthru
      _
    // Predicated region
    $region50: #{tpu_custom_call.1} parent=1 // pred_check
      _
    $region51: #{tpu_custom_call.1} parent=1 // pred_check_branch
      %350 = sbr.rel (0) target = $region53
    $region52: #{tpu_custom_call.1} parent=1 // pred_region
      %351 = dma.done [#allocation5], 32
    $region53: #{tpu_custom_call.1} parent=1 // pred_fallthru
      _
    %352 = vsyncpa [#allocation4], 1
    %353 = vsyncpa [#allocation7], 1
    %354 = vsyncpa [#allocation5], 1

</llo_original>
